<compile_context>
chip_gen: v7x
topology: tpu7x:2x2x1
jax: 0.10.0
libtpu: 0.0.40
codegen_flags: <defaults>
</compile_context>

<pallas_src>
import functools

import jax
import jax.numpy as jnp
from jax import lax
from jax.experimental import pallas as pl
from jax.experimental.pallas import tpu as pltpu
import numpy as np


def _cdiv(a, b):
    return -(-a // b)


def _round_up(x, m):
    return _cdiv(x, m) * m


# ----------------------------------------------------------------------------
# Pallas kernel: fused matmul + bias-add + ReLU on a lane-dense column block.
# Used for both stages (stage 1: tile conv as im2col matmul; stage 2: 1x1
# conv_trans over the concatenated shifted channels).
# ----------------------------------------------------------------------------
def _mm_bias_relu_kernel(x_ref, w_ref, b_ref, o_ref):
    # x_ref : (R, TN)    bf16   features^T (features on sublanes, pixels on lanes)
    # w_ref : (Cout, R)  bf16   weight with BN scale folded in
    # b_ref : (Cout, 1)  f32    BN bias
    # o_ref : (Cout, TN)        lane-dense output block
    acc = jnp.dot(w_ref[...], x_ref[...], preferred_element_type=jnp.float32)
    o_ref[...] = jnp.maximum(acc + b_ref[...], 0.0).astype(o_ref.dtype)


def _matmul_bias_relu(xT, w, b_col, out_dtype, row_tile_cap):
    """relu(w @ xT + b_col) column-blocked over the lane axis.

    xT: (R, N), w: (Cout, R), b_col: (Cout, 1) -> (Cout, N)."""
    R, N = xT.shape
    Cout = w.shape[0]

    cap = max(128, (row_tile_cap // 128) * 128)
    # Scale the lane tile with N: big enough to amortize per-step pipeline
    # overhead, small enough to keep >= 2 grid steps when N allows it.
    half = _round_up(max(1, _cdiv(N, 2)), 128)
    TN = max(128, min(cap, half))
    Np = _round_up(N, TN)
    grid = Np // TN

    if Np != N:
        xT = jnp.pad(xT, ((0, 0), (0, Np - N)))

    out = pl.pallas_call(
        _mm_bias_relu_kernel,
        out_shape=jax.ShapeDtypeStruct((Cout, Np), out_dtype),
        grid_spec=pltpu.PrefetchScalarGridSpec(
            num_scalar_prefetch=0,
            grid=(grid,),
            in_specs=[
                pl.BlockSpec((R, TN), lambda i: (0, i)),
                pl.BlockSpec((Cout, R), lambda i: (0, 0)),
                pl.BlockSpec((Cout, 1), lambda i: (0, 0)),
            ],
            out_specs=pl.BlockSpec((Cout, TN), lambda i: (0, i)),
        ),
        compiler_params=pltpu.CompilerParams(
            dimension_semantics=("parallel",)),
    )(xT, w, b_col)

    # Padded columns computed relu(bias) garbage -- sliced off here.
    return out[:, :N]


# ----------------------------------------------------------------------------
# Glue: feature-major valid im2col (plain JAX), no shift duplication.
# ----------------------------------------------------------------------------
def _im2col_valid_T(x, k, dilation):
    """x: (b, c, Hb, Wb) NCHW -> patches^T (c*k*k, b*Yh*Yw), plus Yh, Yw.

    Valid (no extra padding), stride 1.  Feature order is (c, dy, dx),
    matching wc_oihw.reshape(O, -1)."""
    b, c, Hb, Wb = x.shape
    Yh = Hb - dilation * (k - 1)
    Yw = Wb - dilation * (k - 1)
    cols = []
    for dy in range(k):
        for dx in range(k):
            cols.append(x[:, :, dy * dilation:dy * dilation + Yh,
                                dx * dilation:dx * dilation + Yw])
    p = jnp.stack(cols, axis=2)                   # (b, c, k*k, Yh, Yw)
    p = p.transpose(1, 2, 0, 3, 4)                # (c, k*k, b, Yh, Yw)
    return p.reshape(c * k * k, b * Yh * Yw), Yh, Yw


@functools.partial(jax.jit, static_argnames=(
    "tile_size", "kernel_size", "stride", "padding", "dilation", "row_tile"))
def tl_conv_forward(x, wc, s1, b1, wt, s2, b2, *,
                    tile_size, kernel_size, stride, padding, dilation,
                    row_tile=2048):
    b, c, h, w = x.shape
    T2 = tile_size * tile_size
    pad_t = tile_size // 2
    Cd = wc.shape[1]
    Co = wt.shape[1]

    # Shared-convs[0] shift-slice rewrite validity (exact zero-padding match).
    assert padding == 0 or (tile_size - 1) <= pad_t, (
        "shared-conv rewrite requires tile_size <= 2 or padding == 0")

    # --- Stage 1: one tile-conv on the fully padded image -------------------
    P = pad_t + padding                 # TLConv pad + BasicConv conv pad
    xb = x.astype(jnp.bfloat16)         # bf16 halves HBM traffic on the im2col
    xbig = jnp.pad(xb, ((0, 0), (0, 0), (P, P), (P, P)))

    patches1T, Yh, Yw = _im2col_valid_T(xbig, kernel_size, dilation)  # (K, N1)
    N1 = patches1T.shape[1]

    W1 = (wc * s1[None, :]).T.astype(jnp.bfloat16)      # (Cd, K), BN1 folded
    b1_col = b1.reshape(Cd, 1).astype(jnp.float32)

    yT = _matmul_bias_relu(patches1T, W1, b1_col, jnp.bfloat16, row_tile)

    # --- Stage 2: T2 shifted / strided slices of Y + 1x1 conv_trans ---------
    Hf = h + 2 * pad_t - (tile_size - 1)     # per-shift feat height
    Wf = w + 2 * pad_t - (tile_size - 1)
    Ho = (Hf + 2 * padding - dilation * (kernel_size - 1) - 1) // stride + 1
    Wo = (Wf + 2 * padding - dilation * (kernel_size - 1) - 1) // stride + 1

    Y = yT.reshape(Cd, b, Yh, Yw)            # bf16, tiny (Cd channels)
    subs = []
    for i in range(tile_size):
        for j in range(tile_size):
            subs.append(Y[:, :, i: i + (Ho - 1) * stride + 1: stride,
                                j: j + (Wo - 1) * stride + 1: stride])
    # channel order = shift*Cd + d, matching torch.cat(outs, dim=1)
    patches2T = jnp.stack(subs, axis=0).reshape(T2 * Cd, b * Ho * Wo)

    W2 = (wt * s2[None, :]).T.astype(jnp.bfloat16)      # (Co, T2*Cd), BN2 folded
    b2_col = b2.reshape(Co, 1).astype(jnp.float32)

    outT = _matmul_bias_relu(patches2T, W2, b2_col, jnp.float32, row_tile)

    # (Co, N2) -> NCHW (b, Co, Ho, Wo)
    return outT.reshape(Co, b, Ho, Wo).transpose(1, 0, 2, 3)


# ----------------------------------------------------------------------------
# Pure-JAX reference (lax.conv) mirroring the PyTorch forward, for verification
# (per-shift convs[0], explicit concat -- independently checks the rewrite).
# ----------------------------------------------------------------------------
def tl_conv_reference(x, wc_oihw, s1, b1, wt_oihw, s2, b2, *,
                      tile_size, stride, padding, dilation):
    pad_t = tile_size // 2
    xp = jnp.pad(x, ((0, 0), (0, 0), (pad_t, pad_t), (pad_t, pad_t)))
    Hp, Wp = xp.shape[2], xp.shape[3]
    outs = []
    for i in range(tile_size):
        for j in range(tile_size):
            feat = xp[:, :, i:Hp - (tile_size - i - 1),
                            j:Wp - (tile_size - j - 1)]
            y = lax.conv_general_dilated(
                feat, wc_oihw, (stride, stride),
                [(padding, padding), (padding, padding)],
                rhs_dilation=(dilation, dilation),
                dimension_numbers=("NCHW", "OIHW", "NCHW"))
            y = jnp.maximum(y * s1.reshape(1, -1, 1, 1)
                            + b1.reshape(1, -1, 1, 1), 0.0)
            outs.append(y)
    cat = jnp.concatenate(outs, axis=1)
    z = lax.conv_general_dilated(
        cat, wt_oihw, (1, 1), [(0, 0), (0, 0)],
        dimension_numbers=("NCHW", "OIHW", "NCHW"))
    return jnp.maximum(z * s2.reshape(1, -1, 1, 1)
                       + b2.reshape(1, -1, 1, 1), 0.0)


if __name__ == "__main__":
    # Module hyper-parameters (small, consistent with TLConv.__init__)
    in_planes, out_planes = 4, 8
    kernel_size, stride, padding, dilation = 3, 1, 1, 1
    tile_size = 2
    T2 = tile_size * tile_size
    out_planes_div = max(out_planes // T2, 1)          # = 2
    eps = 1e-5

    key = jax.random.PRNGKey(0)
    ks = jax.random.split(key, 12)

    # Input (NCHW, matching PyTorch)
    x = jax.random.normal(ks[0], (2, in_planes, 16, 16), jnp.float32)

    # convs[0] (the only conv actually used by the PyTorch forward)
    wc_oihw = jax.random.normal(
        ks[1], (out_planes_div, in_planes, kernel_size, kernel_size),
        jnp.float32) * 0.1
    g1 = 1.0 + 0.1 * jax.random.normal(ks[2], (out_planes_div,), jnp.float32)
    be1 = 0.1 * jax.random.normal(ks[3], (out_planes_div,), jnp.float32)
    m1 = 0.1 * jax.random.normal(ks[4], (out_planes_div,), jnp.float32)
    v1 = jax.random.uniform(ks[5], (out_planes_div,), jnp.float32, 0.5, 1.5)

    # conv_trans: 1x1 conv (T2*out_planes_div -> out_planes) + BN + ReLU
    wt_oihw = jax.random.normal(
        ks[6], (out_planes, out_planes_div * T2, 1, 1), jnp.float32) * 0.1
    g2 = 1.0 + 0.1 * jax.random.normal(ks[7], (out_planes,), jnp.float32)
    be2 = 0.1 * jax.random.normal(ks[8], (out_planes,), jnp.float32)
    m2 = 0.1 * jax.random.normal(ks[9], (out_planes,), jnp.float32)
    v2 = jax.random.uniform(ks[10], (out_planes,), jnp.float32, 0.5, 1.5)

    # Fold BN (inference mode) into scale/bias
    s1 = g1 / jnp.sqrt(v1 + eps)
    b1 = be1 - m1 * s1
    s2 = g2 / jnp.sqrt(v2 + eps)
    b2 = be2 - m2 * s2

    # Kernel-layout weights: (K=Cin*k*k, Cd) and (T2*Cd, Co)
    wc = wc_oihw.reshape(out_planes_div, -1).T
    wt = wt_oihw.reshape(out_planes, -1).T

    out = tl_conv_forward(
        x, wc, s1, b1, wt, s2, b2,
        tile_size=tile_size, kernel_size=kernel_size,
        stride=stride, padding=padding, dilation=dilation,
        row_tile=2048)
    out = jax.block_until_ready(out)

    ref = tl_conv_reference(
        x, wc_oihw, s1, b1, wt_oihw, s2, b2,
        tile_size=tile_size, stride=stride, padding=padding,
        dilation=dilation)
    ref = jax.block_until_ready(ref)

    assert out.shape == ref.shape, (out.shape, ref.shape)
    # bf16 patches / weights / intermediate in the kernel path -> looser
    # tolerance than pure f32
    np.testing.assert_allclose(np.asarray(out), np.asarray(ref),
                               rtol=2e-2, atol=2e-2)
    print("KERNEL_OK")
</pallas_src>

<mosaic_0001>
module attributes {stable_mosaic.version = 11 : i64} {
  func.func @_mm_bias_relu_kernel(%arg0: i32, %arg1: memref<36x384xbf16, #tpu.memory_space<vmem>>, %arg2: memref<2x36xbf16, #tpu.memory_space<vmem>>, %arg3: memref<2x1xf32, #tpu.memory_space<vmem>>, %arg4: memref<2x384xbf16, #tpu.memory_space<vmem>>) attributes {dimension_semantics = [#tpu.dimension_semantics<parallel>], iteration_bounds = array<i64: 2>, scalar_prefetch = 0 : i64, scratch_operands = 0 : i64, tpu.core_type = #tpu.core_type<tc>, window_params = [{transform_indices = @transform_0, window_bounds = array<i64: 36, 384>}, {pipeline_mode = #tpu.pipeline_mode<synchronous>, transform_indices = @transform_1, window_bounds = array<i64: 2, 36>}, {pipeline_mode = #tpu.pipeline_mode<synchronous>, transform_indices = @transform_2, window_bounds = array<i64: 2, 1>}, {transform_indices = @transform_3, window_bounds = array<i64: 2, 384>}]} {
    %c0 = arith.constant 0 : index
    %c0_0 = arith.constant 0 : index
    %0 = vector.load %arg2[%c0, %c0_0] : memref<2x36xbf16, #tpu.memory_space<vmem>>, vector<2x36xbf16>
    %c0_1 = arith.constant 0 : index
    %c0_2 = arith.constant 0 : index
    %1 = vector.load %arg1[%c0_1, %c0_2] : memref<36x384xbf16, #tpu.memory_space<vmem>>, vector<36x384xbf16>
    %cst = arith.constant dense<0.000000e+00> : vector<2x384xf32>
    %2 = tpu.matmul %0, %1, %cst {dimension_numbers = #tpu.dot_dimension_numbers<[1], [0], [0], [1], [0, 0, 1, 1], [], []>} : vector<2x36xbf16>, vector<36x384xbf16>, vector<2x384xf32> -> vector<2x384xf32>
    %c0_3 = arith.constant 0 : index
    %c0_4 = arith.constant 0 : index
    %3 = vector.load %arg3[%c0_3, %c0_4] : memref<2x1xf32, #tpu.memory_space<vmem>>, vector<2x1xf32>
    %4 = vector.broadcast %3 : vector<2x1xf32> to vector<2x384xf32>
    %5 = arith.addf %2, %4 : vector<2x384xf32>
    %cst_5 = arith.constant 0.000000e+00 : f32
    %6 = vector.broadcast %cst_5 : f32 to vector<2x384xf32>
    %7 = arith.maximumf %5, %6 : vector<2x384xf32>
    %8 = arith.truncf %7 : vector<2x384xf32> to vector<2x384xbf16>
    %c0_6 = arith.constant 0 : index
    %c0_7 = arith.constant 0 : index
    %9 = vector.load %arg4[%c0_6, %c0_7] : memref<2x384xbf16, #tpu.memory_space<vmem>>, vector<2x384xbf16>
    tpu.vector_store %arg4[%c0_6, %c0_7], %8 {strides = array<i32>} : memref<2x384xbf16, #tpu.memory_space<vmem>>, vector<2x384xbf16>,
    return
  }
  func.func @transform_0(%arg0: i32) -> (i32, i32) {
    %c0_i32 = arith.constant 0 : i32
    %c0_i32_0 = arith.constant 0 : i32
    return %c0_i32, %arg0 : i32, i32
  }
  func.func @transform_1(%arg0: i32) -> (i32, i32) {
    %c0_i32 = arith.constant 0 : i32
    %c0_i32_0 = arith.constant 0 : i32
    %c0_i32_1 = arith.constant 0 : i32
    return %c0_i32, %c0_i32_0 : i32, i32
  }
  func.func @transform_2(%arg0: i32) -> (i32, i32) {
    %c0_i32 = arith.constant 0 : i32
    %c0_i32_0 = arith.constant 0 : i32
    %c0_i32_1 = arith.constant 0 : i32
    return %c0_i32, %c0_i32_0 : i32, i32
  }
  func.func @transform_3(%arg0: i32) -> (i32, i32) {
    %c0_i32 = arith.constant 0 : i32
    %c0_i32_0 = arith.constant 0 : i32
    return %c0_i32, %arg0 : i32, i32
  }
}

module attributes {stable_mosaic.version = 11 : i64} {
  func.func @_mm_bias_relu_kernel(%arg0: i32, %arg1: memref<8x384xbf16, #tpu.memory_space<vmem>>, %arg2: memref<8x8xbf16, #tpu.memory_space<vmem>>, %arg3: memref<8x1xf32, #tpu.memory_space<vmem>>, %arg4: memref<8x384xf32, #tpu.memory_space<vmem>>) attributes {dimension_semantics = [#tpu.dimension_semantics<parallel>], iteration_bounds = array<i64: 2>, scalar_prefetch = 0 : i64, scratch_operands = 0 : i64, tpu.core_type = #tpu.core_type<tc>, window_params = [{transform_indices = @transform_0, window_bounds = array<i64: 8, 384>}, {pipeline_mode = #tpu.pipeline_mode<synchronous>, transform_indices = @transform_1, window_bounds = array<i64: 8, 8>}, {pipeline_mode = #tpu.pipeline_mode<synchronous>, transform_indices = @transform_2, window_bounds = array<i64: 8, 1>}, {transform_indices = @transform_3, window_bounds = array<i64: 8, 384>}]} {
    %c0 = arith.constant 0 : index
    %c0_0 = arith.constant 0 : index
    %0 = vector.load %arg2[%c0, %c0_0] : memref<8x8xbf16, #tpu.memory_space<vmem>>, vector<8x8xbf16>
    %c0_1 = arith.constant 0 : index
    %c0_2 = arith.constant 0 : index
    %1 = vector.load %arg1[%c0_1, %c0_2] : memref<8x384xbf16, #tpu.memory_space<vmem>>, vector<8x384xbf16>
    %cst = arith.constant dense<0.000000e+00> : vector<8x384xf32>
    %2 = tpu.matmul %0, %1, %cst {dimension_numbers = #tpu.dot_dimension_numbers<[1], [0], [0], [1], [0, 0, 1, 1], [], []>} : vector<8x8xbf16>, vector<8x384xbf16>, vector<8x384xf32> -> vector<8x384xf32>
    %c0_3 = arith.constant 0 : index
    %c0_4 = arith.constant 0 : index
    %3 = vector.load %arg3[%c0_3, %c0_4] : memref<8x1xf32, #tpu.memory_space<vmem>>, vector<8x1xf32>
    %4 = vector.broadcast %3 : vector<8x1xf32> to vector<8x384xf32>
    %5 = arith.addf %2, %4 : vector<8x384xf32>
    %cst_5 = arith.constant 0.000000e+00 : f32
    %6 = vector.broadcast %cst_5 : f32 to vector<8x384xf32>
    %7 = arith.maximumf %5, %6 : vector<8x384xf32>
    %c0_6 = arith.constant 0 : index
    %c0_7 = arith.constant 0 : index
    %8 = vector.load %arg4[%c0_6, %c0_7] : memref<8x384xf32, #tpu.memory_space<vmem>>, vector<8x384xf32>
    tpu.vector_store %arg4[%c0_6, %c0_7], %7 {strides = array<i32>} : memref<8x384xf32, #tpu.memory_space<vmem>>, vector<8x384xf32>,
    return
  }
  func.func @transform_0(%arg0: i32) -> (i32, i32) {
    %c0_i32 = arith.constant 0 : i32
    %c0_i32_0 = arith.constant 0 : i32
    return %c0_i32, %arg0 : i32, i32
  }
  func.func @transform_1(%arg0: i32) -> (i32, i32) {
    %c0_i32 = arith.constant 0 : i32
    %c0_i32_0 = arith.constant 0 : i32
    %c0_i32_1 = arith.constant 0 : i32
    return %c0_i32, %c0_i32_0 : i32, i32
  }
  func.func @transform_2(%arg0: i32) -> (i32, i32) {
    %c0_i32 = arith.constant 0 : i32
    %c0_i32_0 = arith.constant 0 : i32
    %c0_i32_1 = arith.constant 0 : i32
    return %c0_i32, %c0_i32_0 : i32, i32
  }
  func.func @transform_3(%arg0: i32) -> (i32, i32) {
    %c0_i32 = arith.constant 0 : i32
    %c0_i32_0 = arith.constant 0 : i32
    return %c0_i32, %arg0 : i32, i32
  }
}

</mosaic_0001>

<llo_original>
// kernel: tl_conv_forward.2
$region0: #{tl_conv_forward.2}
  #allocation0 [shape = 'u32[]', space=smem, size = 0x4, offset = 0x4, fixed_abs, tag = 'smem constant byte address 0x4 - core index']
  #allocation1 [shape = 'u32[144,128]{1,0:T(1,128)}', space=vmem, size = 0x12000, scoped, tag = 'internal scratch']
  %s0 = inlined_call_operand.vmem [shape: bf16[36,768], index: 0, kind: input, shape index: {}]
  %s1 = inlined_call_operand.vmem [shape: bf16[2,36], index: 1, kind: input, shape index: {}]
  %s2 = inlined_call_operand.vmem [shape: f32[2,1], index: 2, kind: input, shape index: {}]
  %s3 = inlined_call_operand.vmem [shape: bf16[2,768], index: 3, kind: output, shape index: {}]
  %s4 = sld [smem:[#allocation0]]
  $region71: #{tl_conv_forward.2} parent=0
    _
  %s6 = ssub.s32 1, %s4
  %s7 = scalar_select 0, %s6, %s4
  $region1: #{tl_conv_forward.2} parent=0
    #allocation2 [shape = 'u8[61440]{0}', space=vmem, size = 0xf000, scoped, tag = 'input window, operand 0']
    loop: start=0, step=1, limit=4
    $region2: #{tl_conv_forward.2} parent=1 // loop_pre_header
      _
    $region3: #{tl_conv_forward.2} parent=1 // loop_header
      %s9 = sphi 0, %s13
      %p10 = scmp.ge.s32.totalorder %s9, 4
      %s19 = sphi 0, %s21
      %s22 = sphi 0, %s19
      %s23 = sphi 0, %s22
      %s39 = sphi 0, %s23
      %s43 = sphi 0, %s43
      %s45 = sphi 0, %s43
      %s46 = sphi 0, %s45
      %s60 = sphi 0, %s46
      %s64 = sphi 0, %s64
      %s66 = sphi 0, %s64
      %s67 = sphi 0, %s66
      %s81 = sphi 0, %s67
      %s87 = sphi 0, %s89
      %s90 = sphi 0, %s87
      %s91 = sphi 0, %s90
      %s107 = sphi 0, %s91
    $region4: #{tl_conv_forward.2} parent=1 // loop_header_branch
      %12 = sbr.rel (%p10) target = $region8
    $region5: #{tl_conv_forward.2} parent=1 // loop_body
      %s14 = ssub.s32 %s9, 1
      %s15 = ssub.s32 %s9, 2
      %s16 = sadd.s32 %s9, 1
      %s17 = ssub.s32 %s9, %s16
      %p18 = scmp.eq.s32.totalorder %s17, 0
      %s20 = sadd.s32 %s19, 1
      %s21 = scalar_select %p18, %s19, %s20
      %p24 = pneg %p18
      %p25 = scmp.eq.s32.totalorder %s9, 1
      %p26 = por %p24, %p25
      %p27 = scmp.ne.s32.totalorder %s19, %s22
      %p28 = scmp.eq.s32.totalorder %s9, 0
      %p29 = por %p27, %p28
      %p30 = scmp.ne.s32.totalorder %s19, %s22
      %p31 = scmp.eq.s32.totalorder %s14, 1
      %p32 = por %p30, %p31
      %p33 = scmp.ne.s32.totalorder %s22, %s23
      %p34 = scmp.eq.s32.totalorder %s14, 0
      %p35 = por %p33, %p34
      %p36 = scmp.ne.s32.totalorder %s22, %s23
      %p37 = scmp.eq.s32.totalorder %s15, 1
      %p38 = por %p36, %p37
      %p40 = scmp.ne.s32.totalorder %s23, %s39
      %p41 = scmp.eq.s32.totalorder %s15, 0
      %p42 = por %p40, %p41
      %s44 = sadd.s32 %s43, 1
      %p47 = scmp.eq.s32.totalorder %s9, 1
      %p48 = scmp.ne.s32.totalorder %s43, %s45
      %p49 = scmp.eq.s32.totalorder %s9, 0
      %p50 = por %p48, %p49
      %p51 = scmp.ne.s32.totalorder %s43, %s45
      %p52 = scmp.eq.s32.totalorder %s14, 1
      %p53 = por %p51, %p52
      %p54 = scmp.ne.s32.totalorder %s45, %s46
      %p55 = scmp.eq.s32.totalorder %s14, 0
      %p56 = por %p54, %p55
      %p57 = scmp.ne.s32.totalorder %s45, %s46
      %p58 = scmp.eq.s32.totalorder %s15, 1
      %p59 = por %p57, %p58
      %p61 = scmp.ne.s32.totalorder %s46, %s60
      %p62 = scmp.eq.s32.totalorder %s15, 0
      %p63 = por %p61, %p62
      %s65 = sadd.s32 %s64, 1
      %p68 = scmp.eq.s32.totalorder %s9, 1
      %p69 = scmp.ne.s32.totalorder %s64, %s66
      %p70 = scmp.eq.s32.totalorder %s9, 0
      %p71 = por %p69, %p70
      %p72 = scmp.ne.s32.totalorder %s64, %s66
      %p73 = scmp.eq.s32.totalorder %s14, 1
      %p74 = por %p72, %p73
      %p75 = scmp.ne.s32.totalorder %s66, %s67
      %p76 = scmp.eq.s32.totalorder %s14, 0
      %p77 = por %p75, %p76
      %p78 = scmp.ne.s32.totalorder %s66, %s67
      %p79 = scmp.eq.s32.totalorder %s15, 1
      %p80 = por %p78, %p79
      %p82 = scmp.ne.s32.totalorder %s67, %s81
      %p83 = scmp.eq.s32.totalorder %s15, 0
      %p84 = por %p82, %p83
      %s85 = ssub.s32 %s9, %s16
      %p86 = scmp.eq.s32.totalorder %s85, 0
      %s88 = sadd.s32 %s87, 1
      %s89 = scalar_select %p86, %s87, %s88
      %p92 = pneg %p86
      %p93 = scmp.eq.s32.totalorder %s9, 1
      %p94 = por %p92, %p93
      %p95 = scmp.ne.s32.totalorder %s87, %s90
      %p96 = scmp.eq.s32.totalorder %s9, 0
      %p97 = por %p95, %p96
      %p98 = scmp.ne.s32.totalorder %s87, %s90
      %p99 = scmp.eq.s32.totalorder %s14, 1
      %p100 = por %p98, %p99
      %p101 = scmp.ne.s32.totalorder %s90, %s91
      %p102 = scmp.eq.s32.totalorder %s14, 0
      %p103 = por %p101, %p102
      %p104 = scmp.ne.s32.totalorder %s90, %s91
      %p105 = scmp.eq.s32.totalorder %s15, 1
      %p106 = por %p104, %p105
      %p108 = scmp.ne.s32.totalorder %s91, %s107
      %p109 = scmp.eq.s32.totalorder %s15, 0
      %p110 = por %p108, %p109
      %p111 = scmp.le.s32.totalorder 1, %s9
      %p112 = scmp.lt.s32.totalorder %s9, 3
      %p113 = pnand %p111, %p112
      %p114 = pneg %p113
      // Predicated region
      $region9: #{tl_conv_forward.2} parent=5 // pred_check
        _
      $region10: #{tl_conv_forward.2} parent=5 // pred_check_branch
        %116 = sbr.rel (%p113) target = $region12
      $region11: #{tl_conv_forward.2} parent=5 // pred_region
        %s117 = ssub.s32 %s9, 1
        // Predicated region
        $region13: #{tl_conv_forward.2} parent=11 // pred_check
          %p118 = pneg %p56
        $region14: #{tl_conv_forward.2} parent=11 // pred_check_branch
          %120 = sbr.rel (%p118) target = $region16
        $region15: #{tl_conv_forward.2} parent=11 // pred_region
          _
        $region16: #{tl_conv_forward.2} parent=11 // pred_fallthru
          _
        // Predicated region
        $region17: #{tl_conv_forward.2} parent=11 // pred_check
          %p121 = pneg %p77
        $region18: #{tl_conv_forward.2} parent=11 // pred_check_branch
          %123 = sbr.rel (%p121) target = $region20
        $region19: #{tl_conv_forward.2} parent=11 // pred_region
          _
        $region20: #{tl_conv_forward.2} parent=11 // pred_fallthru
          _
      $region12: #{tl_conv_forward.2} parent=5 // pred_fallthru
        _
      %p124 = scmp.lt.s32.totalorder %s9, 2
      // Predicated region
      $region21: #{tl_conv_forward.2} parent=5 // pred_check
        %p125 = pneg %p124
      $region22: #{tl_conv_forward.2} parent=5 // pred_check_branch
        %127 = sbr.rel (%p125) target = $region24
      $region23: #{tl_conv_forward.2} parent=5 // pred_region
        // Predicated region
        $region25: #{tl_conv_forward.2} parent=23 // pred_check
          %p128 = pneg %p29
        $region26: #{tl_conv_forward.2} parent=23 // pred_check_branch
          %130 = sbr.rel (%p128) target = $region28
        $region27: #{tl_conv_forward.2} parent=23 // pred_region
          %s131 = sand.u32 %s19, 1
          %s132 = sand.u32 %s19, 1
          %s133 = smul.addr %s132, 60
          %s134 = scalar_lea.vmem [#allocation2], %s133
          %s135 = smul.u32 3, %s9
          %s136 = smul.addr %s135, 4
          %s137 = scalar_lea.vmem %s0, %s136
          // Predicated region
          $region29: #{tl_conv_forward.2} parent=27 // pred_check
            _
          $region30: #{tl_conv_forward.2} parent=27 // pred_check_branch
            %139 = sbr.rel (0) target = $region32
          $region31: #{tl_conv_forward.2} parent=27 // pred_region
            // Predicated region
            $region33: #{tl_conv_forward.2} parent=31 // pred_check
              _
            $region34: #{tl_conv_forward.2} parent=31 // pred_check_branch
              %141 = sbr.rel (0) target = $region36
            $region35: #{tl_conv_forward.2} parent=31 // pred_region
              %s142 = scalar_lea.vmem %s137, 8
              %s143 = scalar_lea.vmem %s134, 8 [#allocation2]
              loop: start=0, step=1, limit=1
              $region37: #{tl_conv_forward.2} parent=35 // loop_pre_header
                _
              $region38: #{tl_conv_forward.2} parent=35 // loop_header
                %s145 = sphi 0, %s149
                %p146 = scmp.ge.s32.totalorder %s145, 1
                %s150 = sphi %s137, %s137
                %s151 = sphi %s134, %s134
              $region39: #{tl_conv_forward.2} parent=35 // loop_header_branch
                %148 = sbr.rel (%p146) target = $region43
              $region40: #{tl_conv_forward.2} parent=35 // loop_body
                %v152 = vld [vmem:[%s150] sm:$0xff]
                %153 = vst [vmem:[%s151] sm:$0xff] %v152
                %v154 = vld [vmem:[%s150 + $0x18] sm:$0xff]
                %155 = vst [vmem:[%s151 + $0xc] sm:$0xff] %v154
                %v156 = vld [vmem:[%s150 + $0x30] sm:$0xff]
                %157 = vst [vmem:[%s151 + $0x18] sm:$0xff] %v156
                %v158 = vld [vmem:[%s150 + $0x48] sm:$0xff]
                %159 = vst [vmem:[%s151 + $0x24] sm:$0xff] %v158
                %v160 = vld [vmem:[%s150 + $0x60] sm:$0xff]
                %161 = vst [vmem:[%s151 + $0x30] sm:$0xff] %v160
              $region41: #{tl_conv_forward.2} parent=35 // loop_footer
                %s149 = sadd.s32 1, %s145
              $region42: #{tl_conv_forward.2} parent=35 // loop_footer_branch
                %144 = sbr.rel target = $region38
              $region43: #{tl_conv_forward.2} parent=35 // loop_exit
                _
              loop: start=0, step=1, limit=1
              $region44: #{tl_conv_forward.2} parent=35 // loop_pre_header
                _
              $region45: #{tl_conv_forward.2} parent=35 // loop_header
                %s164 = sphi 0, %s168
                %p165 = scmp.ge.s32.totalorder %s164, 1
                %s169 = sphi %s142, %s142
                %s170 = sphi %s143, %s143
              $region46: #{tl_conv_forward.2} parent=35 // loop_header_branch
                %167 = sbr.rel (%p165) target = $region50
              $region47: #{tl_conv_forward.2} parent=35 // loop_body
                %v171 = vld [vmem:[%s169] sm:$0xf]
                %172 = vst [vmem:[%s170] sm:$0xf] %v171
                %v173 = vld [vmem:[%s169 + $0x18] sm:$0xf]
                %174 = vst [vmem:[%s170 + $0xc] sm:$0xf] %v173
                %v175 = vld [vmem:[%s169 + $0x30] sm:$0xf]
                %176 = vst [vmem:[%s170 + $0x18] sm:$0xf] %v175
                %v177 = vld [vmem:[%s169 + $0x48] sm:$0xf]
                %178 = vst [vmem:[%s170 + $0x24] sm:$0xf] %v177
                %v179 = vld [vmem:[%s169 + $0x60] sm:$0xf]
                %180 = vst [vmem:[%s170 + $0x30] sm:$0xf] %v179
              $region48: #{tl_conv_forward.2} parent=35 // loop_footer
                %s168 = sadd.s32 1, %s164
              $region49: #{tl_conv_forward.2} parent=35 // loop_footer_branch
                %163 = sbr.rel target = $region45
              $region50: #{tl_conv_forward.2} parent=35 // loop_exit
                _
            $region36: #{tl_conv_forward.2} parent=31 // pred_fallthru
              _
          $region32: #{tl_conv_forward.2} parent=27 // pred_fallthru
            _
          %181 = vnop
        $region28: #{tl_conv_forward.2} parent=23 // pred_fallthru
          _
      $region24: #{tl_conv_forward.2} parent=5 // pred_fallthru
        _
      %p182 = scmp.le.s32.totalorder 1, %s9
      %p183 = scmp.lt.s32.totalorder %s9, 3
      %p184 = pnand %p182, %p183
      %p185 = pneg %p184
      // Predicated region
      $region51: #{tl_conv_forward.2} parent=5 // pred_check
        _
      $region52: #{tl_conv_forward.2} parent=5 // pred_check_branch
        %187 = sbr.rel (%p184) target = $region54
      $region53: #{tl_conv_forward.2} parent=5 // pred_region
        %s188 = ssub.s32 %s9, 1
        %s189 = sand.u32 %s22, 1
        %s190 = sand.u32 %s22, 1
        %s191 = smul.addr %s190, 60
        %s192 = scalar_lea.vmem [#allocation2], %s191
        // Predicated region
        $region55: #{tl_conv_forward.2} parent=53 // pred_check
          %p193 = pneg %p35
        $region56: #{tl_conv_forward.2} parent=53 // pred_check_branch
          %195 = sbr.rel (%p193) target = $region58
        $region57: #{tl_conv_forward.2} parent=53 // pred_region
          _
        $region58: #{tl_conv_forward.2} parent=53 // pred_fallthru
          _
        %s196 = sand.u32 %s22, 1
        %s197 = sand.u32 %s22, 1
        %s198 = smul.addr %s197, 60
        %s199 = scalar_lea.vmem [#allocation2], %s198
        %p200 = pneg %p35
        %p201 = pneg %p32
        %p202 = pneg %p56
        %p203 = pneg %p53
        %p204 = pneg %p77
        %p205 = pneg %p74
        %p206 = pneg %p103
        %p207 = pneg %p100
        %s208 = smul.u32 3, %s14
        %p209 = scmp.lt.s32.totalorder %s208, 5
        %s210 = scalar_select %p209, %s208, 5
        %s211 = scalar_lea.vmem %s3, %s210
        %s212 = smul.u32 3, %s14
        %s213 = smul.u32 3, %s14
        %p214 = scmp.lt.s32.totalorder %s213, 5
        %s215 = scalar_select %p214, %s213, 5
        %s216 = scalar_lea.vmem %s3, %s215
        %s217 = smul.u32 3, %s14
        %v219 = vld [vmem:[%s1] sm:$0x1]
        %v220 = vld [vmem:[%s192] sm:$0xff]
        %v221 = vld [vmem:[%s192 + $0x8] sm:$0xf]
        %v222 = vld [vmem:[%s192 + $0xc] sm:$0xff]
        %v223 = vld [vmem:[%s192 + $0x14] sm:$0xf]
        %v224 = vld [vmem:[%s192 + $0x18] sm:$0xff]
        %v225 = vld [vmem:[%s192 + $0x20] sm:$0xf]
        %v226 = vld [vmem:[%s192 + $0x24] sm:$0xff]
        %v227 = vld [vmem:[%s192 + $0x2c] sm:$0xf]
        %v228 = vld [vmem:[%s192 + $0x30] sm:$0x33]
        %v229 = vld [vmem:[%s192 + $0x38] sm:$0x3]
        %v230 = vld [vmem:[%s2] sm:$0x3]
        %232 = vset.pattern.permute.xlu0 0
        %233 = vperm.xlu0 %232, %v230
        %v234 = vpop.permute.xlu0 %233
        %v246 = vunpack.c.l.b16 %v220
        %v247 = vunpack.c.h.b16 %v220
        %v248 = vunpack.c.l.b16 %v221
        %v249 = vunpack.c.l.b16 %v222
        %v250 = vunpack.c.h.b16 %v222
        %v251 = vunpack.c.l.b16 %v223
        %v252 = vunpack.c.l.b16 %v224
        %v253 = vunpack.c.h.b16 %v224
        %v254 = vunpack.c.l.b16 %v225
        %v255 = vunpack.c.l.b16 %v226
        %v256 = vunpack.c.h.b16 %v226
        %v257 = vunpack.c.l.b16 %v227
        %v258 = vunpack.c.l.b16 %v228
        %v259 = vunpack.c.h.b16 %v228
        %v260 = vunpack.c.l.b16 %v229
        %v261 = vpack.c.b16 %v249, %v246
        %v262 = vpack.c.b16 %v250, %v247
        %v263 = vpack.c.b16 %v251, %v248
        %v264 = vpack.c.b16 %v255, %v252
        %v265 = vpack.c.b16 %v256, %v253
        %v266 = vpack.c.b16 %v257, %v254
        %v267 = vpack.c.b16 %v258, %v258
        %v268 = vpack.c.b16 %v259, %v259
        %v269 = vpack.c.b16 %v260, %v260
        %vm276 = vcmask 293888
        %v278 = vsel %vm276, %v219, 0
        %vm280 = vcmask 1041408
        %v282 = vsel %vm280, %v267, 0
        %v285 = vsel %vm280, %v268, 0
        %v288 = vsel %vm280, %v269, 0
        %290 = vmatprep.subr.bf16.mxu0 %v262
        %291 = vmatpush1.bf16.msra.mxu0 %v261
        %292 = vmatprep.subr.bf16.mxu0 %v265
        %293 = vmatpush1.bf16.msra.mxu0 %v264
        %294 = vmatprep.subr.bf16.mxu0 %v285
        %295 = vmatpush1.bf16.msra.mxu0 %v282
        %296 = vmatprep.subr.bf16.mxu0 0
        %297 = vmatpush1.bf16.msra.mxu0 0
        %298 = vmatprep.subr.bf16.mxu0 0
        %299 = vmatpush1.bf16.msra.mxu0 0
        %300 = vmatprep.subr.bf16.mxu0 0
        %301 = vmatpush1.bf16.msra.mxu0 0
        %302 = vmatprep.subr.bf16.mxu0 0
        %303 = vmatpush1.bf16.msra.mxu0 0
        %304 = vmatprep.subr.bf16.mxu0 0
        %305 = vmatpush1.bf16.msra.mxu0 0
        %306 = vmatprep.subr.bf16.mxu0 0
        %307 = vmatpush1.bf16.msra.mxu0 0
        %308 = vmatprep.subr.bf16.mxu0 0
        %309 = vmatpush1.bf16.msra.mxu0 0
        %310 = vmatprep.subr.bf16.mxu0 0
        %311 = vmatpush1.bf16.msra.mxu0 0
        %312 = vmatprep.subr.bf16.mxu0 0
        %313 = vmatpush1.bf16.msra.mxu0 0
        %314 = vmatprep.subr.bf16.mxu0 0
        %315 = vmatpush1.bf16.msra.mxu0 0
        %316 = vmatprep.subr.bf16.mxu0 0
        %317 = vmatpush1.bf16.msra.mxu0 0
        %318 = vmatprep.subr.bf16.mxu0 0
        %319 = vmatpush1.bf16.msra.mxu0 0
        %320 = vmatprep.subr.bf16.mxu0 0
        %321 = vmatpush1.bf16.msra.mxu0 0
        %322 = vmatprep.mubr.bf16.mxu0 0
        %323 = vmatmul.mubr.bf16.gmra.mrb[0].mxu0 %v278
        %v324 = vpop.f32.mrb[0].mxu0
        %v325 = vadd.f32 %v234, %v324
        %v326 = vpop.f32.mrb[0].mxu0
        %v327 = vadd.f32 %v234, %v326
        %v328 = vpop.f32.mrb[0].mxu0
        %v329 = vpop.f32.mrb[0].mxu0
        %330 = vdwg.mxu0
        %331 = vmatprep.subr.bf16.mxu0 0
        %332 = vmatpush1.bf16.msra.mxu0 %v263
        %333 = vmatprep.subr.bf16.mxu0 0
        %334 = vmatpush1.bf16.msra.mxu0 %v266
        %335 = vmatprep.subr.bf16.mxu0 0
        %336 = vmatpush1.bf16.msra.mxu0 %v288
        %337 = vmatprep.subr.bf16.mxu0 0
        %338 = vmatpush1.bf16.msra.mxu0 0
        %339 = vmatprep.subr.bf16.mxu0 0
        %340 = vmatpush1.bf16.msra.mxu0 0
        %341 = vmatprep.subr.bf16.mxu0 0
        %342 = vmatpush1.bf16.msra.mxu0 0
        %343 = vmatprep.subr.bf16.mxu0 0
        %344 = vmatpush1.bf16.msra.mxu0 0
        %345 = vmatprep.subr.bf16.mxu0 0
        %346 = vmatpush1.bf16.msra.mxu0 0
        %347 = vmatprep.subr.bf16.mxu0 0
        %348 = vmatpush1.bf16.msra.mxu0 0
        %349 = vmatprep.subr.bf16.mxu0 0
        %350 = vmatpush1.bf16.msra.mxu0 0
        %351 = vmatprep.subr.bf16.mxu0 0
        %352 = vmatpush1.bf16.msra.mxu0 0
        %353 = vmatprep.subr.bf16.mxu0 0
        %354 = vmatpush1.bf16.msra.mxu0 0
        %355 = vmatprep.subr.bf16.mxu0 0
        %356 = vmatpush1.bf16.msra.mxu0 0
        %357 = vmatprep.subr.bf16.mxu0 0
        %358 = vmatpush1.bf16.msra.mxu0 0
        %359 = vmatprep.subr.bf16.mxu0 0
        %360 = vmatpush1.bf16.msra.mxu0 0
        %361 = vmatprep.subr.bf16.mxu0 0
        %362 = vmatpush1.bf16.msra.mxu0 0
        %363 = vmatprep.mubr.bf16.mxu0 0
        %364 = vmatmul.mubr.bf16.gmra.mrb[0].mxu0 %v278
        %v365 = vpop.f32.mrb[0].mxu0
        %v366 = vadd.f32 %v234, %v365
        %v367 = vpop.f32.mrb[0].mxu0
        %v368 = vpop.f32.mrb[0].mxu0
        %v369 = vpop.f32.mrb[0].mxu0
        %370 = vdwg.mxu0
        %v371 = vmax.f32 %v325, 0.0
        %v372 = vmax.f32 %v327, 0.0
        %v373 = vmax.f32 %v366, 0.0
        %v374 = vpack.c.bf16 %v371, %v371
        %v375 = vpack.c.bf16 %v372, %v372
        %v376 = vpack.c.bf16 %v373, %v373
        %v380 = vcombine.low %v374, %v375
        %v382 = vunpack.c.l.s4 1966171168
        %v383 = vunpack.c.0.s8 %v382
        %v384 = vlaneseq
        %v385 = vshrl.u32 %v384, 7
        %v386 = vsub.s32 %v383, %v385
        %v387 = vrot.slane %v380, %v386
        %v389 = vunpack.c.l.s4 1966171168
        %v390 = vunpack.c.0.s8 %v389
        %v391 = vlaneseq
        %v392 = vshrl.u32 %v391, 7
        %v393 = vsub.s32 %v390, %v392
        %v394 = vrot.slane %v376, %v393
        %v395 = vcombine.low %v387, %v394
        %v397 = vunpack.c.l.s4 1966171168
        %v398 = vunpack.c.0.s8 %v397
        %v399 = vlaneseq
        %v400 = vshrl.u32 %v399, 7
        %v401 = vsub.s32 %v398, %v400
        %v402 = vrot.slane %v395, %v401
        %404 = vst [vmem:[%s216] sm:$0x7] %v402
        %s405 = smul.u32 3, %s14
        %p406 = scmp.lt.s32.totalorder %s405, 5
        %s407 = scalar_select %p406, %s405, 5
        %s408 = scalar_lea.vmem %s3, %s407
        // Predicated region
        $region59: #{tl_conv_forward.2} parent=53 // pred_check
          %p409 = pneg %p100
        $region60: #{tl_conv_forward.2} parent=53 // pred_check_branch
          %411 = sbr.rel (%p409) target = $region62
        $region61: #{tl_conv_forward.2} parent=53 // pred_region
          %s412 = smul.u32 3, %s14
        $region62: #{tl_conv_forward.2} parent=53 // pred_fallthru
          _
      $region54: #{tl_conv_forward.2} parent=5 // pred_fallthru
        _
      %p413 = scmp.le.s32.totalorder 2, %s9
      // Predicated region
      $region63: #{tl_conv_forward.2} parent=5 // pred_check
        %p414 = pneg %p413
      $region64: #{tl_conv_forward.2} parent=5 // pred_check_branch
        %416 = sbr.rel (%p414) target = $region66
      $region65: #{tl_conv_forward.2} parent=5 // pred_region
        %s417 = ssub.s32 %s9, 2
        // Predicated region
        $region67: #{tl_conv_forward.2} parent=65 // pred_check
          %p418 = pneg %p106
        $region68: #{tl_conv_forward.2} parent=65 // pred_check_branch
          %420 = sbr.rel (%p418) target = $region70
        $region69: #{tl_conv_forward.2} parent=65 // pred_region
          %s421 = smul.u32 3, %s15
          %p422 = scmp.lt.s32.totalorder %s421, 5
          %s423 = scalar_select %p422, %s421, 5
          %s424 = scalar_lea.vmem %s3, %s423
        $region70: #{tl_conv_forward.2} parent=65 // pred_fallthru
          _
      $region66: #{tl_conv_forward.2} parent=5 // pred_fallthru
        _
    $region6: #{tl_conv_forward.2} parent=1 // loop_footer
      %s13 = sadd.s32 1, %s9
    $region7: #{tl_conv_forward.2} parent=1 // loop_footer_branch
      %8 = sbr.rel target = $region3
    $region8: #{tl_conv_forward.2} parent=1 // loop_exit
      _

// kernel: tl_conv_forward.3
$region0: #{tl_conv_forward.3}
  #allocation0 [shape = 'u32[]', space=smem, size = 0x4, offset = 0x4, fixed_abs, tag = 'smem constant byte address 0x4 - core index']
  #allocation1 [shape = 'u32[144,128]{1,0:T(1,128)}', space=vmem, size = 0x12000, scoped, tag = 'internal scratch']
  %s0 = inlined_call_operand.vmem [shape: bf16[8,768], index: 0, kind: input, shape index: {}]
  %s1 = inlined_call_operand.vmem [shape: bf16[8,8], index: 1, kind: input, shape index: {}]
  %s2 = inlined_call_operand.vmem [shape: f32[8,1], index: 2, kind: input, shape index: {}]
  %s3 = inlined_call_operand.vmem [shape: f32[8,768], index: 3, kind: output, shape index: {}]
  %s4 = sld [smem:[#allocation0]]
  $region45: #{tl_conv_forward.3} parent=0
    _
  %s6 = ssub.s32 1, %s4
  %s7 = scalar_select 0, %s6, %s4
  loop: start=0, step=1, limit=4
  $region2: #{tl_conv_forward.3} parent=0 // loop_pre_header
    _
  $region3: #{tl_conv_forward.3} parent=0 // loop_header
    %s9 = sphi 0, %s13
    %p10 = scmp.ge.s32.totalorder %s9, 4
    %s19 = sphi 0, %s21
    %s22 = sphi 0, %s19
    %s23 = sphi 0, %s22
    %s39 = sphi 0, %s23
    %s43 = sphi 0, %s43
    %s45 = sphi 0, %s43
    %s46 = sphi 0, %s45
    %s60 = sphi 0, %s46
    %s64 = sphi 0, %s64
    %s66 = sphi 0, %s64
    %s67 = sphi 0, %s66
    %s81 = sphi 0, %s67
    %s87 = sphi 0, %s89
    %s90 = sphi 0, %s87
    %s91 = sphi 0, %s90
    %s107 = sphi 0, %s91
  $region4: #{tl_conv_forward.3} parent=0 // loop_header_branch
    %12 = sbr.rel (%p10) target = $region8
  $region5: #{tl_conv_forward.3} parent=0 // loop_body
    %s14 = ssub.s32 %s9, 1
    %s15 = ssub.s32 %s9, 2
    %s16 = sadd.s32 %s9, 1
    %s17 = ssub.s32 %s9, %s16
    %p18 = scmp.eq.s32.totalorder %s17, 0
    %s20 = sadd.s32 %s19, 1
    %s21 = scalar_select %p18, %s19, %s20
    %p24 = pneg %p18
    %p25 = scmp.eq.s32.totalorder %s9, 1
    %p26 = por %p24, %p25
    %p27 = scmp.ne.s32.totalorder %s19, %s22
    %p28 = scmp.eq.s32.totalorder %s9, 0
    %p29 = por %p27, %p28
    %p30 = scmp.ne.s32.totalorder %s19, %s22
    %p31 = scmp.eq.s32.totalorder %s14, 1
    %p32 = por %p30, %p31
    %p33 = scmp.ne.s32.totalorder %s22, %s23
    %p34 = scmp.eq.s32.totalorder %s14, 0
    %p35 = por %p33, %p34
    %p36 = scmp.ne.s32.totalorder %s22, %s23
    %p37 = scmp.eq.s32.totalorder %s15, 1
    %p38 = por %p36, %p37
    %p40 = scmp.ne.s32.totalorder %s23, %s39
    %p41 = scmp.eq.s32.totalorder %s15, 0
    %p42 = por %p40, %p41
    %s44 = sadd.s32 %s43, 1
    %p47 = scmp.eq.s32.totalorder %s9, 1
    %p48 = scmp.ne.s32.totalorder %s43, %s45
    %p49 = scmp.eq.s32.totalorder %s9, 0
    %p50 = por %p48, %p49
    %p51 = scmp.ne.s32.totalorder %s43, %s45
    %p52 = scmp.eq.s32.totalorder %s14, 1
    %p53 = por %p51, %p52
    %p54 = scmp.ne.s32.totalorder %s45, %s46
    %p55 = scmp.eq.s32.totalorder %s14, 0
    %p56 = por %p54, %p55
    %p57 = scmp.ne.s32.totalorder %s45, %s46
    %p58 = scmp.eq.s32.totalorder %s15, 1
    %p59 = por %p57, %p58
    %p61 = scmp.ne.s32.totalorder %s46, %s60
    %p62 = scmp.eq.s32.totalorder %s15, 0
    %p63 = por %p61, %p62
    %s65 = sadd.s32 %s64, 1
    %p68 = scmp.eq.s32.totalorder %s9, 1
    %p69 = scmp.ne.s32.totalorder %s64, %s66
    %p70 = scmp.eq.s32.totalorder %s9, 0
    %p71 = por %p69, %p70
    %p72 = scmp.ne.s32.totalorder %s64, %s66
    %p73 = scmp.eq.s32.totalorder %s14, 1
    %p74 = por %p72, %p73
    %p75 = scmp.ne.s32.totalorder %s66, %s67
    %p76 = scmp.eq.s32.totalorder %s14, 0
    %p77 = por %p75, %p76
    %p78 = scmp.ne.s32.totalorder %s66, %s67
    %p79 = scmp.eq.s32.totalorder %s15, 1
    %p80 = por %p78, %p79
    %p82 = scmp.ne.s32.totalorder %s67, %s81
    %p83 = scmp.eq.s32.totalorder %s15, 0
    %p84 = por %p82, %p83
    %s85 = ssub.s32 %s9, %s16
    %p86 = scmp.eq.s32.totalorder %s85, 0
    %s88 = sadd.s32 %s87, 1
    %s89 = scalar_select %p86, %s87, %s88
    %p92 = pneg %p86
    %p93 = scmp.eq.s32.totalorder %s9, 1
    %p94 = por %p92, %p93
    %p95 = scmp.ne.s32.totalorder %s87, %s90
    %p96 = scmp.eq.s32.totalorder %s9, 0
    %p97 = por %p95, %p96
    %p98 = scmp.ne.s32.totalorder %s87, %s90
    %p99 = scmp.eq.s32.totalorder %s14, 1
    %p100 = por %p98, %p99
    %p101 = scmp.ne.s32.totalorder %s90, %s91
    %p102 = scmp.eq.s32.totalorder %s14, 0
    %p103 = por %p101, %p102
    %p104 = scmp.ne.s32.totalorder %s90, %s91
    %p105 = scmp.eq.s32.totalorder %s15, 1
    %p106 = por %p104, %p105
    %p108 = scmp.ne.s32.totalorder %s91, %s107
    %p109 = scmp.eq.s32.totalorder %s15, 0
    %p110 = por %p108, %p109
    %p111 = scmp.le.s32.totalorder 1, %s9
    %p112 = scmp.lt.s32.totalorder %s9, 3
    %p113 = pnand %p111, %p112
    %p114 = pneg %p113
    // Predicated region
    $region9: #{tl_conv_forward.3} parent=5 // pred_check
      _
    $region10: #{tl_conv_forward.3} parent=5 // pred_check_branch
      %116 = sbr.rel (%p113) target = $region12
    $region11: #{tl_conv_forward.3} parent=5 // pred_region
      %s117 = ssub.s32 %s9, 1
      // Predicated region
      $region13: #{tl_conv_forward.3} parent=11 // pred_check
        %p118 = pneg %p56
      $region14: #{tl_conv_forward.3} parent=11 // pred_check_branch
        %120 = sbr.rel (%p118) target = $region16
      $region15: #{tl_conv_forward.3} parent=11 // pred_region
        _
      $region16: #{tl_conv_forward.3} parent=11 // pred_fallthru
        _
      // Predicated region
      $region17: #{tl_conv_forward.3} parent=11 // pred_check
        %p121 = pneg %p77
      $region18: #{tl_conv_forward.3} parent=11 // pred_check_branch
        %123 = sbr.rel (%p121) target = $region20
      $region19: #{tl_conv_forward.3} parent=11 // pred_region
        _
      $region20: #{tl_conv_forward.3} parent=11 // pred_fallthru
        _
    $region12: #{tl_conv_forward.3} parent=5 // pred_fallthru
      _
    %p124 = scmp.lt.s32.totalorder %s9, 2
    // Predicated region
    $region21: #{tl_conv_forward.3} parent=5 // pred_check
      %p125 = pneg %p124
    $region22: #{tl_conv_forward.3} parent=5 // pred_check_branch
      %127 = sbr.rel (%p125) target = $region24
    $region23: #{tl_conv_forward.3} parent=5 // pred_region
      // Predicated region
      $region25: #{tl_conv_forward.3} parent=23 // pred_check
        %p128 = pneg %p29
      $region26: #{tl_conv_forward.3} parent=23 // pred_check_branch
        %130 = sbr.rel (%p128) target = $region28
      $region27: #{tl_conv_forward.3} parent=23 // pred_region
        %s131 = smul.u32 3, %s9
        %p132 = scmp.lt.s32.totalorder %s131, 5
        %s133 = scalar_select %p132, %s131, 5
        %s134 = smul.addr %s133, 4
        %s135 = scalar_lea.vmem %s0, %s134
        %s136 = smul.u32 3, %s9
      $region28: #{tl_conv_forward.3} parent=23 // pred_fallthru
        _
    $region24: #{tl_conv_forward.3} parent=5 // pred_fallthru
      _
    %p137 = scmp.le.s32.totalorder 1, %s9
    %p138 = scmp.lt.s32.totalorder %s9, 3
    %p139 = pnand %p137, %p138
    %p140 = pneg %p139
    // Predicated region
    $region29: #{tl_conv_forward.3} parent=5 // pred_check
      _
    $region30: #{tl_conv_forward.3} parent=5 // pred_check_branch
      %142 = sbr.rel (%p139) target = $region32
    $region31: #{tl_conv_forward.3} parent=5 // pred_region
      %s143 = ssub.s32 %s9, 1
      %s144 = smul.u32 3, %s14
      %p145 = scmp.lt.s32.totalorder %s144, 5
      %s146 = scalar_select %p145, %s144, 5
      %s147 = smul.addr %s146, 4
      %s148 = scalar_lea.vmem %s0, %s147
      %p149 = pneg %p35
      %p150 = pneg %p32
      %p151 = pneg %p56
      %p152 = pneg %p53
      %p153 = pneg %p77
      %p154 = pneg %p74
      %p155 = pneg %p103
      %p156 = pneg %p100
      %s157 = smul.u32 3, %s14
      %p158 = scmp.lt.s32.totalorder %s157, 5
      %s159 = scalar_select %p158, %s157, 5
      %s160 = smul.addr %s159, 8
      %s161 = scalar_lea.vmem %s3, %s160
      %s162 = smul.u32 3, %s14
      %p163 = scmp.lt.s32.totalorder %s162, 5
      %s164 = scalar_select %p163, %s162, 5
      %s165 = smul.addr %s164, 4
      %s166 = scalar_lea.vmem %s0, %s165
      %s167 = smul.u32 3, %s14
      %s168 = smul.u32 3, %s14
      %p169 = scmp.lt.s32.totalorder %s168, 5
      %s170 = scalar_select %p169, %s168, 5
      %s171 = smul.addr %s170, 8
      %s172 = scalar_lea.vmem %s3, %s171
      %s173 = smul.u32 3, %s14
      %v175 = vld [vmem:[%s1] sm:$0xf]
      %v176 = vld [vmem:[%s166] sm:$0xff]
      %v177 = vld [vmem:[%s166 + $0x8] sm:$0xf]
      %v178 = vld [vmem:[%s2] sm:$0xff]
      %180 = vset.pattern.permute.xlu0 0
      %181 = vperm.xlu0 %180, %v178
      %v182 = vpop.permute.xlu0 %181
      %v186 = vunpack.c.l.b16 %v176
      %v187 = vunpack.c.h.b16 %v176
      %v188 = vunpack.c.l.b16 %v177
      %v189 = vpack.c.b16 %v186, %v186
      %v190 = vpack.c.b16 %v187, %v187
      %v191 = vpack.c.b16 %v188, %v188
      %vm192 = vcmask 64512
      %v194 = vsel %vm192, %v175, 0
      %vm196 = vcmask 1043456
      %v198 = vsel %vm196, %v189, 0
      %v201 = vsel %vm196, %v190, 0
      %v204 = vsel %vm196, %v191, 0
      %206 = vmatprep.subr.bf16.mxu0 %v201
      %207 = vmatpush1.bf16.msra.mxu0 %v198
      %208 = vmatprep.subr.bf16.mxu0 0
      %209 = vmatpush1.bf16.msra.mxu0 0
      %210 = vmatprep.subr.bf16.mxu0 0
      %211 = vmatpush1.bf16.msra.mxu0 0
      %212 = vmatprep.subr.bf16.mxu0 0
      %213 = vmatpush1.bf16.msra.mxu0 0
      %214 = vmatprep.subr.bf16.mxu0 0
      %215 = vmatpush1.bf16.msra.mxu0 0
      %216 = vmatprep.subr.bf16.mxu0 0
      %217 = vmatpush1.bf16.msra.mxu0 0
      %218 = vmatprep.subr.bf16.mxu0 0
      %219 = vmatpush1.bf16.msra.mxu0 0
      %220 = vmatprep.subr.bf16.mxu0 0
      %221 = vmatpush1.bf16.msra.mxu0 0
      %222 = vmatprep.subr.bf16.mxu0 0
      %223 = vmatpush1.bf16.msra.mxu0 0
      %224 = vmatprep.subr.bf16.mxu0 0
      %225 = vmatpush1.bf16.msra.mxu0 0
      %226 = vmatprep.subr.bf16.mxu0 0
      %227 = vmatpush1.bf16.msra.mxu0 0
      %228 = vmatprep.subr.bf16.mxu0 0
      %229 = vmatpush1.bf16.msra.mxu0 0
      %230 = vmatprep.subr.bf16.mxu0 0
      %231 = vmatpush1.bf16.msra.mxu0 0
      %232 = vmatprep.subr.bf16.mxu0 0
      %233 = vmatpush1.bf16.msra.mxu0 0
      %234 = vmatprep.subr.bf16.mxu0 0
      %235 = vmatpush1.bf16.msra.mxu0 0
      %236 = vmatprep.subr.bf16.mxu0 0
      %237 = vmatpush1.bf16.msra.mxu0 0
      %238 = vmatprep.mubr.bf16.mxu0 0
      %239 = vmatmul.mubr.bf16.gmra.mrb[0].mxu0 %v194
      %v240 = vpop.f32.mrb[0].mxu0
      %v241 = vadd.f32 %v182, %v240
      %v242 = vpop.f32.mrb[0].mxu0
      %v243 = vadd.f32 %v182, %v242
      %v244 = vpop.f32.mrb[0].mxu0
      %v245 = vpop.f32.mrb[0].mxu0
      %246 = vdwg.mxu0
      %247 = vmatprep.subr.bf16.mxu0 0
      %248 = vmatpush1.bf16.msra.mxu0 %v204
      %249 = vmatprep.subr.bf16.mxu0 0
      %250 = vmatpush1.bf16.msra.mxu0 0
      %251 = vmatprep.subr.bf16.mxu0 0
      %252 = vmatpush1.bf16.msra.mxu0 0
      %253 = vmatprep.subr.bf16.mxu0 0
      %254 = vmatpush1.bf16.msra.mxu0 0
      %255 = vmatprep.subr.bf16.mxu0 0
      %256 = vmatpush1.bf16.msra.mxu0 0
      %257 = vmatprep.subr.bf16.mxu0 0
      %258 = vmatpush1.bf16.msra.mxu0 0
      %259 = vmatprep.subr.bf16.mxu0 0
      %260 = vmatpush1.bf16.msra.mxu0 0
      %261 = vmatprep.subr.bf16.mxu0 0
      %262 = vmatpush1.bf16.msra.mxu0 0
      %263 = vmatprep.subr.bf16.mxu0 0
      %264 = vmatpush1.bf16.msra.mxu0 0
      %265 = vmatprep.subr.bf16.mxu0 0
      %266 = vmatpush1.bf16.msra.mxu0 0
      %267 = vmatprep.subr.bf16.mxu0 0
      %268 = vmatpush1.bf16.msra.mxu0 0
      %269 = vmatprep.subr.bf16.mxu0 0
      %270 = vmatpush1.bf16.msra.mxu0 0
      %271 = vmatprep.subr.bf16.mxu0 0
      %272 = vmatpush1.bf16.msra.mxu0 0
      %273 = vmatprep.subr.bf16.mxu0 0
      %274 = vmatpush1.bf16.msra.mxu0 0
      %275 = vmatprep.subr.bf16.mxu0 0
      %276 = vmatpush1.bf16.msra.mxu0 0
      %277 = vmatprep.subr.bf16.mxu0 0
      %278 = vmatpush1.bf16.msra.mxu0 0
      %279 = vmatprep.mubr.bf16.mxu0 0
      %280 = vmatmul.mubr.bf16.gmra.mrb[0].mxu0 %v194
      %v281 = vpop.f32.mrb[0].mxu0
      %v282 = vadd.f32 %v182, %v281
      %v283 = vpop.f32.mrb[0].mxu0
      %v284 = vpop.f32.mrb[0].mxu0
      %v285 = vpop.f32.mrb[0].mxu0
      %286 = vdwg.mxu0
      %v287 = vmax.f32 %v241, 0.0
      %v288 = vmax.f32 %v243, 0.0
      %v289 = vmax.f32 %v282, 0.0
      %290 = vst [vmem:[%s172] sm:$0xff] %v287
      %291 = vst [vmem:[%s172 + $0x8] sm:$0xff] %v288
      %292 = vst [vmem:[%s172 + $0x10] sm:$0xff] %v289
      %s293 = smul.u32 3, %s14
      %p294 = scmp.lt.s32.totalorder %s293, 5
      %s295 = scalar_select %p294, %s293, 5
      %s296 = smul.addr %s295, 8
      %s297 = scalar_lea.vmem %s3, %s296
      // Predicated region
      $region33: #{tl_conv_forward.3} parent=31 // pred_check
        %p298 = pneg %p100
      $region34: #{tl_conv_forward.3} parent=31 // pred_check_branch
        %300 = sbr.rel (%p298) target = $region36
      $region35: #{tl_conv_forward.3} parent=31 // pred_region
        %s301 = smul.u32 3, %s14
      $region36: #{tl_conv_forward.3} parent=31 // pred_fallthru
        _
    $region32: #{tl_conv_forward.3} parent=5 // pred_fallthru
      _
    %p302 = scmp.le.s32.totalorder 2, %s9
    // Predicated region
    $region37: #{tl_conv_forward.3} parent=5 // pred_check
      %p303 = pneg %p302
    $region38: #{tl_conv_forward.3} parent=5 // pred_check_branch
      %305 = sbr.rel (%p303) target = $region40
    $region39: #{tl_conv_forward.3} parent=5 // pred_region
      %s306 = ssub.s32 %s9, 2
      // Predicated region
      $region41: #{tl_conv_forward.3} parent=39 // pred_check
        %p307 = pneg %p106
      $region42: #{tl_conv_forward.3} parent=39 // pred_check_branch
        %309 = sbr.rel (%p307) target = $region44
      $region43: #{tl_conv_forward.3} parent=39 // pred_region
        %s310 = smul.u32 3, %s15
        %p311 = scmp.lt.s32.totalorder %s310, 5
        %s312 = scalar_select %p311, %s310, 5
        %s313 = smul.addr %s312, 8
        %s314 = scalar_lea.vmem %s3, %s313
      $region44: #{tl_conv_forward.3} parent=39 // pred_fallthru
        _
    $region40: #{tl_conv_forward.3} parent=5 // pred_fallthru
      _
  $region6: #{tl_conv_forward.3} parent=0 // loop_footer
    %s13 = sadd.s32 1, %s9
  $region7: #{tl_conv_forward.3} parent=0 // loop_footer_branch
    %8 = sbr.rel target = $region3
  $region8: #{tl_conv_forward.3} parent=0 // loop_exit
    _

</llo_original>
